<compile_context>
chip_gen: v6e
topology: v6e:2x2x1
jax: 0.10.0
libtpu: 0.0.40
codegen_flags: <defaults>
</compile_context>

<pallas_src>
import functools

import jax
import jax.numpy as jnp
from jax.experimental import pallas as pl
from jax.experimental.pallas import tpu as pltpu


# --------------------------------------------------------------------------- #
# Kernel
# --------------------------------------------------------------------------- #
def _slot_allreduce(v, op, *, n_slots, seg):
    """Reduce `v` ([rows, n_slots*seg]) with `op` over the n_slots lane segments
    of width `seg`, broadcasting the result back to every segment.

    Implemented with cyclic lane rotations (pltpu.roll -> XLU) so the data stays
    in its lane-dense layout.  Every cyclic slot offset is combined exactly once
    (log tree for power-of-two n_slots, explicit loop otherwise), so it is exact
    for both max and sum.
    """
    if n_slots == 1:
        return v
    width = n_slots * seg
    if (n_slots & (n_slots - 1)) == 0:      # power of two -> log-depth tree
        out = v
        shift = seg
        while shift < width:
            out = op(out, pltpu.roll(out, shift=shift, axis=1))
            shift *= 2
        return out
    out = v                                  # general n_slots: n-1 rotations
    for k in range(1, n_slots):
        out = op(out, pltpu.roll(v, shift=k * seg, axis=1))
    return out


def _attention_kernel(x_ref, w1_ref, b1_ref, w2_ref, b2_ref, o_ref, *, n_slots, d1):
    x = x_ref[...]                                   # [bs, N*D1]  (lane-dense, f32)
    mm = w1_ref.dtype                                # f32 (exact) or bf16 (fast path)

    # ---- Linear 1 + ReLU: one lane-dense MXU matmul (block-diag packed W1.T) ----
    h = jnp.dot(x.astype(mm), w1_ref[...], preferred_element_type=jnp.float32)
    h = jnp.maximum(h + b1_ref[...], 0.0)            # [bs, N*D2]

    # ---- Linear 2 ----
    s = jnp.dot(h.astype(mm), w2_ref[...], preferred_element_type=jnp.float32)
    s = s + b2_ref[...]                              # [bs, N*D1]

    # ---- softmax over the capsule axis (the N lane segments of width D1) ----
    m = _slot_allreduce(s, jnp.maximum, n_slots=n_slots, seg=d1)
    e = jnp.exp(s - m)
    denom = _slot_allreduce(e, jnp.add, n_slots=n_slots, seg=d1)
    attn = e / denom                                 # exact division: 1e-5 parity

    # ---- gate the input (unmasked, lane-dense store) ----
    o_ref[...] = (x * attn).astype(o_ref.dtype)


# --------------------------------------------------------------------------- #
# Weight packing (done once, outside the kernel)
# --------------------------------------------------------------------------- #
def _block_diag_wT(w, reps):
    """w: [out, in] (PyTorch Linear layout) -> block_diag(w.T, reps copies)."""
    o, i = w.shape
    eye = jnp.eye(reps, dtype=w.dtype)
    return jnp.einsum("ab,oi->aibo", eye, w).reshape(reps * i, reps * o)


def pack_attention_params(w1, b1, w2, b2, n_slots, *, mxu_dtype=jnp.float32):
    d2, d1 = w1.shape
    w1p = _block_diag_wT(w1, n_slots).astype(mxu_dtype)           # [N*D1, N*D2]
    w2p = _block_diag_wT(w2, n_slots).astype(mxu_dtype)           # [N*D2, N*D1]
    b1p = jnp.tile(b1, n_slots).reshape(1, n_slots * d2).astype(jnp.float32)
    b2p = jnp.tile(b2, n_slots).reshape(1, n_slots * d1).astype(jnp.float32)
    return w1p, b1p, w2p, b2p


# --------------------------------------------------------------------------- #
# Wrapper
# --------------------------------------------------------------------------- #
def attention_forward(x, w1, b1, w2, b2, *, block_rows=1024,
                      use_bf16_matmul=False,
                      vmem_limit_bytes=48 * 1024 * 1024):
    """x: [N, D1] or [B, N, D1]; w1: [D2, D1]; b1: [D2]; w2: [D1, D2]; b2: [D1].

    Tuning notes (review): block_rows=1024 (~1 MiB/block) is a good default on
    every generation at the 48 MiB VMEM limit; on v6e/v7x it can be raised to
    2048, on v5e 512-1024 is the sweet spot (slower HBM, smaller scoped VMEM).
    """
    squeeze = x.ndim == 2
    if squeeze:
        x = x[None]
    b, n, d1 = x.shape
    d2 = w1.shape[0]
    lanes = n * d1           # 256 for the CapsGNN defaults (N=8, D1=32)
    # Note: lanes is a multiple of 128 here; other shapes still work but may be
    # less lane-efficient for the in-kernel roll reduction.

    # FREE layout change (replaces the old pack/unpack transposes): merging the
    # trailing contiguous (N, D1) dims is a bitcast — no HBM round trip.
    xf = x.reshape(b, lanes)

    # Balanced row blocking (rows = batch instances; sublane granule = 8 rows).
    SUB = 8
    n_groups = pl.cdiv(b, SUB)
    n_blocks = pl.cdiv(n_groups, max(1, block_rows // SUB))
    if n_groups >= 2:
        n_blocks = max(n_blocks, 2)          # >=2 grid steps -> v7x megacore shard
    groups_per_block = pl.cdiv(n_groups, n_blocks)
    bs = groups_per_block * SUB
    b_pad = n_blocks * bs                    # padding bounded by <8 rows per block
    if b_pad != b:
        xf = jnp.pad(xf, ((0, b_pad - b), (0, 0)))

    mxu_dtype = jnp.bfloat16 if use_bf16_matmul else jnp.float32
    w1p, b1p, w2p, b2p = pack_attention_params(w1, b1, w2, b2, n, mxu_dtype=mxu_dtype)

    kernel = functools.partial(_attention_kernel, n_slots=n, d1=d1)

    # Actual (block-diagonal) MXU work, not logical FLOPs.
    flops = 4 * b_pad * lanes * (n * d2)
    transcendentals = b_pad * lanes
    w_bytes = 2 * lanes * (n * d2) * (2 if use_bf16_matmul else 4)
    bytes_accessed = 4 * 2 * b_pad * lanes + w_bytes + 4 * (lanes + n * d2)

    out = pl.pallas_call(
        kernel,
        out_shape=jax.ShapeDtypeStruct((b_pad, lanes), x.dtype),
        grid_spec=pltpu.PrefetchScalarGridSpec(
            num_scalar_prefetch=0,
            grid=(n_blocks,),
            in_specs=[
                pl.BlockSpec((bs, lanes), lambda i: (i, 0)),        # x rows (lane-dense)
                pl.BlockSpec((lanes, n * d2), lambda i: (0, 0)),    # W1 packed (resident)
                pl.BlockSpec((1, n * d2), lambda i: (0, 0)),        # b1 packed
                pl.BlockSpec((n * d2, lanes), lambda i: (0, 0)),    # W2 packed
                pl.BlockSpec((1, lanes), lambda i: (0, 0)),         # b2 packed
            ],
            out_specs=pl.BlockSpec((bs, lanes), lambda i: (i, 0)),
        ),
        compiler_params=pltpu.CompilerParams(
            dimension_semantics=("parallel",),
            vmem_limit_bytes=vmem_limit_bytes),
        cost_estimate=pl.CostEstimate(
            flops=flops,
            transcendentals=transcendentals,
            bytes_accessed=bytes_accessed),
    )(xf, w1p, b1p, w2p, b2p)

    out = out[:b].reshape(b, n, d1)          # drop pad rows; free reshape back
    if squeeze:
        out = out[0]
    return out


# --------------------------------------------------------------------------- #
# Pure-JAX reference (mirrors the PyTorch module)
# --------------------------------------------------------------------------- #
def attention_reference(x, w1, b1, w2, b2):
    hp = jax.lax.Precision.HIGHEST
    h = jax.nn.relu(jnp.einsum("...nd,ed->...ne", x, w1, precision=hp) + b1)
    s = jnp.einsum("...ne,de->...nd", h, w2, precision=hp) + b2
    attn = jax.nn.softmax(s, axis=-2)        # dim=0 of each [N, D1] instance
    return x * attn


if __name__ == "__main__":
    # attention_size_1 = 32, attention_size_2 = 16, N = 8 capsule rows,
    # B = 64 independent attention instances batched into one kernel call.
    N, D1, D2 = 8, 32, 16
    B = 64

    key = jax.random.PRNGKey(0)
    kx, kw1, kb1, kw2, kb2 = jax.random.split(key, 5)

    x = jax.random.normal(kx, (B, N, D1), dtype=jnp.float32)
    # Deterministic "torch.nn.Linear"-like init (uniform in +-1/sqrt(fan_in)).
    w1 = jax.random.uniform(kw1, (D2, D1), jnp.float32, -1.0, 1.0) / jnp.sqrt(D1)
    b1 = jax.random.uniform(kb1, (D2,), jnp.float32, -1.0, 1.0) / jnp.sqrt(D1)
    w2 = jax.random.uniform(kw2, (D1, D2), jnp.float32, -1.0, 1.0) / jnp.sqrt(D2)
    b2 = jax.random.uniform(kb2, (D1,), jnp.float32, -1.0, 1.0) / jnp.sqrt(D2)

    fwd = jax.jit(attention_forward)

    # Batched path (the performance path; uses >=2 grid steps).
    out = jax.block_until_ready(fwd(x, w1, b1, w2, b2))
    ref = attention_reference(x, w1, b1, w2, b2)
    assert out.shape == (B, N, D1)
    assert jnp.allclose(out, ref, atol=1e-5, rtol=1e-5), "batched mismatch vs reference"

    # Original (unbatched) module call: x_in is [N, D1], softmax over dim=0.
    out1 = jax.block_until_ready(fwd(x[0], w1, b1, w2, b2))
    ref1 = attention_reference(x[0], w1, b1, w2, b2)
    assert out1.shape == (N, D1)
    assert jnp.allclose(out1, ref1, atol=1e-5, rtol=1e-5), "single mismatch vs reference"

    print("KERNEL_OK")
</pallas_src>

<mosaic_0001>
module attributes {stable_mosaic.version = 11 : i64} {
  func.func @_attention_kernel(%arg0: i32, %arg1: memref<32x256xf32, #tpu.memory_space<vmem>>, %arg2: memref<256x128xf32, #tpu.memory_space<vmem>>, %arg3: memref<1x128xf32, #tpu.memory_space<vmem>>, %arg4: memref<128x256xf32, #tpu.memory_space<vmem>>, %arg5: memref<1x256xf32, #tpu.memory_space<vmem>>, %arg6: memref<32x256xf32, #tpu.memory_space<vmem>>) attributes {dimension_semantics = [#tpu.dimension_semantics<parallel>], iteration_bounds = array<i64: 2>, scalar_prefetch = 0 : i64, scratch_operands = 0 : i64, tpu.core_type = #tpu.core_type<tc>, window_params = [{transform_indices = @transform_0, window_bounds = array<i64: 32, 256>}, {pipeline_mode = #tpu.pipeline_mode<synchronous>, transform_indices = @transform_1, window_bounds = array<i64: 256, 128>}, {pipeline_mode = #tpu.pipeline_mode<synchronous>, transform_indices = @transform_2, window_bounds = array<i64: 1, 128>}, {pipeline_mode = #tpu.pipeline_mode<synchronous>, transform_indices = @transform_3, window_bounds = array<i64: 128, 256>}, {pipeline_mode = #tpu.pipeline_mode<synchronous>, transform_indices = @transform_4, window_bounds = array<i64: 1, 256>}, {transform_indices = @transform_5, window_bounds = array<i64: 32, 256>}]} {
    %c0 = arith.constant 0 : index
    %c0_0 = arith.constant 0 : index
    %0 = vector.load %arg1[%c0, %c0_0] : memref<32x256xf32, #tpu.memory_space<vmem>>, vector<32x256xf32>
    %c0_1 = arith.constant 0 : index
    %c0_2 = arith.constant 0 : index
    %1 = vector.load %arg2[%c0_1, %c0_2] : memref<256x128xf32, #tpu.memory_space<vmem>>, vector<256x128xf32>
    %cst = arith.constant dense<0.000000e+00> : vector<32x128xf32>
    %2 = tpu.matmul %0, %1, %cst {dimension_numbers = #tpu.dot_dimension_numbers<[1], [0], [0], [1], [0, 0, 1, 1], [], []>} : vector<32x256xf32>, vector<256x128xf32>, vector<32x128xf32> -> vector<32x128xf32>
    %c0_3 = arith.constant 0 : index
    %c0_4 = arith.constant 0 : index
    %3 = vector.load %arg3[%c0_3, %c0_4] : memref<1x128xf32, #tpu.memory_space<vmem>>, vector<1x128xf32>
    %4 = vector.broadcast %3 : vector<1x128xf32> to vector<32x128xf32>
    %5 = arith.addf %2, %4 : vector<32x128xf32>
    %cst_5 = arith.constant 0.000000e+00 : f32
    %6 = vector.broadcast %cst_5 : f32 to vector<32x128xf32>
    %7 = arith.maximumf %5, %6 : vector<32x128xf32>
    %c0_6 = arith.constant 0 : index
    %c0_7 = arith.constant 0 : index
    %8 = vector.load %arg4[%c0_6, %c0_7] : memref<128x256xf32, #tpu.memory_space<vmem>>, vector<128x256xf32>
    %cst_8 = arith.constant dense<0.000000e+00> : vector<32x256xf32>
    %9 = tpu.matmul %7, %8, %cst_8 {dimension_numbers = #tpu.dot_dimension_numbers<[1], [0], [0], [1], [0, 0, 1, 1], [], []>} : vector<32x128xf32>, vector<128x256xf32>, vector<32x256xf32> -> vector<32x256xf32>
    %c0_9 = arith.constant 0 : index
    %c0_10 = arith.constant 0 : index
    %10 = vector.load %arg5[%c0_9, %c0_10] : memref<1x256xf32, #tpu.memory_space<vmem>>, vector<1x256xf32>
    %11 = vector.broadcast %10 : vector<1x256xf32> to vector<32x256xf32>
    %12 = arith.addf %9, %11 : vector<32x256xf32>
    %c32_i32 = arith.constant 32 : i32
    %13 = tpu.dynamic_rotate %12 by %c32_i32 dim 1 : vector<32x256xf32>, i32 -> vector<32x256xf32>
    %14 = arith.maximumf %12, %13 : vector<32x256xf32>
    %c64_i32 = arith.constant 64 : i32
    %15 = tpu.dynamic_rotate %14 by %c64_i32 dim 1 : vector<32x256xf32>, i32 -> vector<32x256xf32>
    %16 = arith.maximumf %14, %15 : vector<32x256xf32>
    %c128_i32 = arith.constant 128 : i32
    %17 = tpu.dynamic_rotate %16 by %c128_i32 dim 1 : vector<32x256xf32>, i32 -> vector<32x256xf32>
    %18 = arith.maximumf %16, %17 : vector<32x256xf32>
    %19 = arith.subf %12, %18 : vector<32x256xf32>
    %20 = math.exp %19 : vector<32x256xf32>
    %c32_i32_11 = arith.constant 32 : i32
    %21 = tpu.dynamic_rotate %20 by %c32_i32_11 dim 1 : vector<32x256xf32>, i32 -> vector<32x256xf32>
    %22 = arith.addf %20, %21 : vector<32x256xf32>
    %c64_i32_12 = arith.constant 64 : i32
    %23 = tpu.dynamic_rotate %22 by %c64_i32_12 dim 1 : vector<32x256xf32>, i32 -> vector<32x256xf32>
    %24 = arith.addf %22, %23 : vector<32x256xf32>
    %c128_i32_13 = arith.constant 128 : i32
    %25 = tpu.dynamic_rotate %24 by %c128_i32_13 dim 1 : vector<32x256xf32>, i32 -> vector<32x256xf32>
    %26 = arith.addf %24, %25 : vector<32x256xf32>
    %27 = arith.divf %20, %26 : vector<32x256xf32>
    %28 = arith.mulf %0, %27 : vector<32x256xf32>
    %c0_14 = arith.constant 0 : index
    %c0_15 = arith.constant 0 : index
    %29 = vector.load %arg6[%c0_14, %c0_15] : memref<32x256xf32, #tpu.memory_space<vmem>>, vector<32x256xf32>
    tpu.vector_store %arg6[%c0_14, %c0_15], %28 {strides = array<i32>} : memref<32x256xf32, #tpu.memory_space<vmem>>, vector<32x256xf32>,
    return
  }
  func.func @transform_0(%arg0: i32) -> (i32, i32) {
    %c0_i32 = arith.constant 0 : i32
    %c0_i32_0 = arith.constant 0 : i32
    return %arg0, %c0_i32 : i32, i32
  }
  func.func @transform_1(%arg0: i32) -> (i32, i32) {
    %c0_i32 = arith.constant 0 : i32
    %c0_i32_0 = arith.constant 0 : i32
    %c0_i32_1 = arith.constant 0 : i32
    return %c0_i32, %c0_i32_0 : i32, i32
  }
  func.func @transform_2(%arg0: i32) -> (i32, i32) {
    %c0_i32 = arith.constant 0 : i32
    %c0_i32_0 = arith.constant 0 : i32
    %c0_i32_1 = arith.constant 0 : i32
    return %c0_i32, %c0_i32_0 : i32, i32
  }
  func.func @transform_3(%arg0: i32) -> (i32, i32) {
    %c0_i32 = arith.constant 0 : i32
    %c0_i32_0 = arith.constant 0 : i32
    %c0_i32_1 = arith.constant 0 : i32
    return %c0_i32, %c0_i32_0 : i32, i32
  }
  func.func @transform_4(%arg0: i32) -> (i32, i32) {
    %c0_i32 = arith.constant 0 : i32
    %c0_i32_0 = arith.constant 0 : i32
    %c0_i32_1 = arith.constant 0 : i32
    return %c0_i32, %c0_i32_0 : i32, i32
  }
  func.func @transform_5(%arg0: i32) -> (i32, i32) {
    %c0_i32 = arith.constant 0 : i32
    %c0_i32_0 = arith.constant 0 : i32
    return %arg0, %c0_i32 : i32, i32
  }
}

</mosaic_0001>

<llo_original>
// kernel: tile.18
$region0: #{tile.18}
  #allocation0 [shape = 's32[1]{0}', space=sflag, size = 0x4, scoped, tag = 'scoped memory for tile.18']
  %s0 = inlined_call_operand.vmem [shape: f32[32], index: 0, kind: input, shape index: {}]
  %s1 = inlined_call_operand.vmem [shape: f32[8,32], index: 1, kind: output, shape index: {}]
  // Predicated region
  $region2: #{tile.18} parent=0 // pred_check
    _
  $region3: #{tile.18} parent=0 // pred_check_branch
    %3 = sbr.rel (0) target = $region5
  $region4: #{tile.18} parent=0 // pred_region
    _
  $region5: #{tile.18} parent=0 // pred_fallthru
    _
  %v4 = vld [vmem:[%s0] ss:$0 sm:$0xff]
  %5 = vst [vmem:[%s1] sm:$0xff] %v4

// kernel: tile.19
$region0: #{tile.19}
  %s0 = inlined_call_operand.vmem [shape: f32[8,32], index: 0, kind: input, shape index: {}]
  %s1 = inlined_call_operand.vmem [shape: f32[1,256], index: 1, kind: output, shape index: {}]
  $region1: #{tile.19} parent=0
    #allocation0 [shape = 'u8[8192]{0}', space=vmem, size = 0x2000, scoped, tag = 'scoped mem for output reshape']
    %s2 = smov 3
    %v3 = vld [vmem:[%s0] ss:$4 sm:%s2]
    %vm4 = vcmask 261120
    %5 = vst.msk [vmem:[#allocation0] ss:$8 sm:$0x3] %vm4, %v3
    %s6 = scalar_lea.vmem %s0, 3
    %s7 = smov 3
    %v8 = vld [vmem:[%s6] ss:$4 sm:%s7]
    %9 = vrot.lane.b32.xlu0 %v8, 96
    %v10 = vpop.permute.xlu0 %9
    %vm11 = vcmask 1048320
    %12 = vst.msk [vmem:[#allocation0] ss:$8 sm:$0x3] %vm11, %v10
    %s13 = scalar_lea.vmem %s0, 2
    %s14 = smov 3
    %v15 = vld [vmem:[%s13] ss:$4 sm:%s14]
    %16 = vrot.lane.b32.xlu0 %v15, 64
    %v17 = vpop.permute.xlu0 %16
    %vm18 = vcmask 785920
    %19 = vst.msk [vmem:[#allocation0] ss:$8 sm:$0x3] %vm18, %v17
    %s20 = scalar_lea.vmem %s0, 1
    %s21 = smov 3
    %v22 = vld [vmem:[%s20] ss:$4 sm:%s21]
    %23 = vrot.lane.b32.xlu0 %v22, 32
    %v24 = vpop.permute.xlu0 %23
    %vm25 = vcmask 523520
    %26 = vst.msk [vmem:[#allocation0] ss:$8 sm:$0x3] %vm25, %v24
    %s28 = sshll.u32 1, 1
    %s29 = ssub.s32 %s28, 1
    %v31 = vld [vmem:[#allocation0] sm:%s29]
    %s32 = sshll.u32 1, 1
    %s33 = ssub.s32 %s32, 1
    %34 = vst [vmem:[%s1] sm:%s33] %v31
    %s35 = scalar_lea.vmem [#allocation0], 8
    %v36 = vld [vmem:[%s35] sm:%s29]
    %s37 = sshll.u32 1, 1
    %s38 = ssub.s32 %s37, 1
    %s39 = scalar_lea.vmem %s1, 1
    %40 = vst [vmem:[%s39] sm:%s38] %v36

// kernel: tile.13
$region0: #{tile.13}
  #allocation0 [shape = 's32[1]{0}', space=sflag, size = 0x4, scoped, tag = 'scoped memory for tile.13']
  %s0 = inlined_call_operand.vmem [shape: f32[16], index: 0, kind: input, shape index: {}]
  %s1 = inlined_call_operand.vmem [shape: f32[8,16], index: 1, kind: output, shape index: {}]
  // Predicated region
  $region2: #{tile.13} parent=0 // pred_check
    _
  $region3: #{tile.13} parent=0 // pred_check_branch
    %3 = sbr.rel (0) target = $region5
  $region4: #{tile.13} parent=0 // pred_region
    _
  $region5: #{tile.13} parent=0 // pred_fallthru
    _
  %v4 = vld [vmem:[%s0] ss:$0 sm:$0xff]
  %5 = vst [vmem:[%s1] sm:$0xff] %v4

// kernel: tile.14
$region0: #{tile.14}
  %s0 = inlined_call_operand.vmem [shape: f32[8,16], index: 0, kind: input, shape index: {}]
  %s1 = inlined_call_operand.vmem [shape: f32[1,128], index: 1, kind: output, shape index: {}]
  $region1: #{tile.14} parent=0
    #allocation0 [shape = 'u8[4096]{0}', space=vmem, size = 0x1000, scoped, tag = 'scoped mem for output reshape']
    %v2 = vld [vmem:[%s0] sm:$0x1]
    %vm3 = vcmask 130048
    %4 = vst.msk [vmem:[#allocation0] sm:$0x1] %vm3, %v2
    %s5 = scalar_lea.vmem %s0, 7
    %v6 = vld [vmem:[%s5] sm:$0x1]
    %7 = vrot.lane.b32.xlu0 %v6, 112
    %v8 = vpop.permute.xlu0 %7
    %vm9 = vcmask 1048448
    %10 = vst.msk [vmem:[#allocation0] sm:$0x1] %vm9, %v8
    %s11 = scalar_lea.vmem %s0, 6
    %v12 = vld [vmem:[%s11] sm:$0x1]
    %13 = vrot.lane.b32.xlu0 %v12, 96
    %v14 = vpop.permute.xlu0 %13
    %vm15 = vcmask 917248
    %16 = vst.msk [vmem:[#allocation0] sm:$0x1] %vm15, %v14
    %s17 = scalar_lea.vmem %s0, 5
    %v18 = vld [vmem:[%s17] sm:$0x1]
    %19 = vrot.lane.b32.xlu0 %v18, 80
    %v20 = vpop.permute.xlu0 %19
    %vm21 = vcmask 786048
    %22 = vst.msk [vmem:[#allocation0] sm:$0x1] %vm21, %v20
    %s23 = scalar_lea.vmem %s0, 4
    %v24 = vld [vmem:[%s23] sm:$0x1]
    %25 = vrot.lane.b32.xlu0 %v24, 64
    %v26 = vpop.permute.xlu0 %25
    %vm27 = vcmask 654848
    %28 = vst.msk [vmem:[#allocation0] sm:$0x1] %vm27, %v26
    %s29 = scalar_lea.vmem %s0, 3
    %v30 = vld [vmem:[%s29] sm:$0x1]
    %31 = vrot.lane.b32.xlu0 %v30, 48
    %v32 = vpop.permute.xlu0 %31
    %vm33 = vcmask 523648
    %34 = vst.msk [vmem:[#allocation0] sm:$0x1] %vm33, %v32
    %s35 = scalar_lea.vmem %s0, 2
    %v36 = vld [vmem:[%s35] sm:$0x1]
    %37 = vrot.lane.b32.xlu0 %v36, 32
    %v38 = vpop.permute.xlu0 %37
    %vm39 = vcmask 392448
    %40 = vst.msk [vmem:[#allocation0] sm:$0x1] %vm39, %v38
    %s41 = scalar_lea.vmem %s0, 1
    %v42 = vld [vmem:[%s41] sm:$0x1]
    %43 = vrot.lane.b32.xlu0 %v42, 16
    %v44 = vpop.permute.xlu0 %43
    %vm45 = vcmask 261248
    %46 = vst.msk [vmem:[#allocation0] sm:$0x1] %vm45, %v44
    %s48 = sshll.u32 1, 1
    %s49 = ssub.s32 %s48, 1
    %v51 = vld [vmem:[#allocation0] sm:%s49]
    %s52 = sshll.u32 1, 1
    %s53 = ssub.s32 %s52, 1
    %54 = vst [vmem:[%s1] sm:%s53] %v51

// kernel: attention_forward.1
$region0: #{attention_forward.1}
  #allocation0 [shape = 'u32[]', space=smem, size = 0x4, offset = 0x4, fixed_abs, tag = 'smem constant byte address 0x4 - core index']
  #allocation1 [shape = 'u32[144,128]{1,0:T(1,128)}', space=vmem, size = 0x12000, scoped, tag = 'internal scratch']
  %s0 = inlined_call_operand.vmem [shape: f32[64,256], index: 0, kind: input, shape index: {}]
  %s1 = inlined_call_operand.vmem [shape: f32[256,128], index: 1, kind: input, shape index: {}]
  %s2 = inlined_call_operand.vmem [shape: f32[1,128], index: 2, kind: input, shape index: {}]
  %s3 = inlined_call_operand.vmem [shape: f32[128,256], index: 3, kind: input, shape index: {}]
  %s4 = inlined_call_operand.vmem [shape: f32[1,256], index: 4, kind: input, shape index: {}]
  %s5 = inlined_call_operand.vmem [shape: f32[64,256], index: 5, kind: output, shape index: {}]
  %s6 = sld [smem:[#allocation0]]
  $region53: #{attention_forward.1} parent=0
    _
  %s8 = ssub.s32 1, %s6
  %s9 = scalar_select 0, %s8, %s6
  loop: start=0, step=1, limit=4
  $region2: #{attention_forward.1} parent=0 // loop_pre_header
    _
  $region3: #{attention_forward.1} parent=0 // loop_header
    %s11 = sphi 0, %s15
    %p12 = scmp.ge.s32.totalorder %s11, 4
    %s21 = sphi 0, %s23
    %s24 = sphi 0, %s21
    %s25 = sphi 0, %s24
    %s41 = sphi 0, %s25
    %s45 = sphi 0, %s45
    %s47 = sphi 0, %s45
    %s48 = sphi 0, %s47
    %s62 = sphi 0, %s48
    %s66 = sphi 0, %s66
    %s68 = sphi 0, %s66
    %s69 = sphi 0, %s68
    %s83 = sphi 0, %s69
    %s87 = sphi 0, %s87
    %s89 = sphi 0, %s87
    %s90 = sphi 0, %s89
    %s104 = sphi 0, %s90
    %s108 = sphi 0, %s108
    %s110 = sphi 0, %s108
    %s111 = sphi 0, %s110
    %s125 = sphi 0, %s111
    %s131 = sphi 0, %s133
    %s134 = sphi 0, %s131
    %s135 = sphi 0, %s134
    %s151 = sphi 0, %s135
  $region4: #{attention_forward.1} parent=0 // loop_header_branch
    %14 = sbr.rel (%p12) target = $region8
  $region5: #{attention_forward.1} parent=0 // loop_body
    %s16 = ssub.s32 %s11, 1
    %s17 = ssub.s32 %s11, 2
    %s18 = sadd.s32 %s11, 1
    %s19 = ssub.s32 %s11, %s18
    %p20 = scmp.eq.s32.totalorder %s19, 0
    %s22 = sadd.s32 %s21, 1
    %s23 = scalar_select %p20, %s21, %s22
    %p26 = pneg %p20
    %p27 = scmp.eq.s32.totalorder %s11, 1
    %p28 = por %p26, %p27
    %p29 = scmp.ne.s32.totalorder %s21, %s24
    %p30 = scmp.eq.s32.totalorder %s11, 0
    %p31 = por %p29, %p30
    %p32 = scmp.ne.s32.totalorder %s21, %s24
    %p33 = scmp.eq.s32.totalorder %s16, 1
    %p34 = por %p32, %p33
    %p35 = scmp.ne.s32.totalorder %s24, %s25
    %p36 = scmp.eq.s32.totalorder %s16, 0
    %p37 = por %p35, %p36
    %p38 = scmp.ne.s32.totalorder %s24, %s25
    %p39 = scmp.eq.s32.totalorder %s17, 1
    %p40 = por %p38, %p39
    %p42 = scmp.ne.s32.totalorder %s25, %s41
    %p43 = scmp.eq.s32.totalorder %s17, 0
    %p44 = por %p42, %p43
    %s46 = sadd.s32 %s45, 1
    %p49 = scmp.eq.s32.totalorder %s11, 1
    %p50 = scmp.ne.s32.totalorder %s45, %s47
    %p51 = scmp.eq.s32.totalorder %s11, 0
    %p52 = por %p50, %p51
    %p53 = scmp.ne.s32.totalorder %s45, %s47
    %p54 = scmp.eq.s32.totalorder %s16, 1
    %p55 = por %p53, %p54
    %p56 = scmp.ne.s32.totalorder %s47, %s48
    %p57 = scmp.eq.s32.totalorder %s16, 0
    %p58 = por %p56, %p57
    %p59 = scmp.ne.s32.totalorder %s47, %s48
    %p60 = scmp.eq.s32.totalorder %s17, 1
    %p61 = por %p59, %p60
    %p63 = scmp.ne.s32.totalorder %s48, %s62
    %p64 = scmp.eq.s32.totalorder %s17, 0
    %p65 = por %p63, %p64
    %s67 = sadd.s32 %s66, 1
    %p70 = scmp.eq.s32.totalorder %s11, 1
    %p71 = scmp.ne.s32.totalorder %s66, %s68
    %p72 = scmp.eq.s32.totalorder %s11, 0
    %p73 = por %p71, %p72
    %p74 = scmp.ne.s32.totalorder %s66, %s68
    %p75 = scmp.eq.s32.totalorder %s16, 1
    %p76 = por %p74, %p75
    %p77 = scmp.ne.s32.totalorder %s68, %s69
    %p78 = scmp.eq.s32.totalorder %s16, 0
    %p79 = por %p77, %p78
    %p80 = scmp.ne.s32.totalorder %s68, %s69
    %p81 = scmp.eq.s32.totalorder %s17, 1
    %p82 = por %p80, %p81
    %p84 = scmp.ne.s32.totalorder %s69, %s83
    %p85 = scmp.eq.s32.totalorder %s17, 0
    %p86 = por %p84, %p85
    %s88 = sadd.s32 %s87, 1
    %p91 = scmp.eq.s32.totalorder %s11, 1
    %p92 = scmp.ne.s32.totalorder %s87, %s89
    %p93 = scmp.eq.s32.totalorder %s11, 0
    %p94 = por %p92, %p93
    %p95 = scmp.ne.s32.totalorder %s87, %s89
    %p96 = scmp.eq.s32.totalorder %s16, 1
    %p97 = por %p95, %p96
    %p98 = scmp.ne.s32.totalorder %s89, %s90
    %p99 = scmp.eq.s32.totalorder %s16, 0
    %p100 = por %p98, %p99
    %p101 = scmp.ne.s32.totalorder %s89, %s90
    %p102 = scmp.eq.s32.totalorder %s17, 1
    %p103 = por %p101, %p102
    %p105 = scmp.ne.s32.totalorder %s90, %s104
    %p106 = scmp.eq.s32.totalorder %s17, 0
    %p107 = por %p105, %p106
    %s109 = sadd.s32 %s108, 1
    %p112 = scmp.eq.s32.totalorder %s11, 1
    %p113 = scmp.ne.s32.totalorder %s108, %s110
    %p114 = scmp.eq.s32.totalorder %s11, 0
    %p115 = por %p113, %p114
    %p116 = scmp.ne.s32.totalorder %s108, %s110
    %p117 = scmp.eq.s32.totalorder %s16, 1
    %p118 = por %p116, %p117
    %p119 = scmp.ne.s32.totalorder %s110, %s111
    %p120 = scmp.eq.s32.totalorder %s16, 0
    %p121 = por %p119, %p120
    %p122 = scmp.ne.s32.totalorder %s110, %s111
    %p123 = scmp.eq.s32.totalorder %s17, 1
    %p124 = por %p122, %p123
    %p126 = scmp.ne.s32.totalorder %s111, %s125
    %p127 = scmp.eq.s32.totalorder %s17, 0
    %p128 = por %p126, %p127
    %s129 = ssub.s32 %s11, %s18
    %p130 = scmp.eq.s32.totalorder %s129, 0
    %s132 = sadd.s32 %s131, 1
    %s133 = scalar_select %p130, %s131, %s132
    %p136 = pneg %p130
    %p137 = scmp.eq.s32.totalorder %s11, 1
    %p138 = por %p136, %p137
    %p139 = scmp.ne.s32.totalorder %s131, %s134
    %p140 = scmp.eq.s32.totalorder %s11, 0
    %p141 = por %p139, %p140
    %p142 = scmp.ne.s32.totalorder %s131, %s134
    %p143 = scmp.eq.s32.totalorder %s16, 1
    %p144 = por %p142, %p143
    %p145 = scmp.ne.s32.totalorder %s134, %s135
    %p146 = scmp.eq.s32.totalorder %s16, 0
    %p147 = por %p145, %p146
    %p148 = scmp.ne.s32.totalorder %s134, %s135
    %p149 = scmp.eq.s32.totalorder %s17, 1
    %p150 = por %p148, %p149
    %p152 = scmp.ne.s32.totalorder %s135, %s151
    %p153 = scmp.eq.s32.totalorder %s17, 0
    %p154 = por %p152, %p153
    %p155 = scmp.le.s32.totalorder 1, %s11
    %p156 = scmp.lt.s32.totalorder %s11, 3
    %p157 = pnand %p155, %p156
    %p158 = pneg %p157
    // Predicated region
    $region9: #{attention_forward.1} parent=5 // pred_check
      _
    $region10: #{attention_forward.1} parent=5 // pred_check_branch
      %160 = sbr.rel (%p157) target = $region12
    $region11: #{attention_forward.1} parent=5 // pred_region
      %s161 = ssub.s32 %s11, 1
      // Predicated region
      $region13: #{attention_forward.1} parent=11 // pred_check
        %p162 = pneg %p58
      $region14: #{attention_forward.1} parent=11 // pred_check_branch
        %164 = sbr.rel (%p162) target = $region16
      $region15: #{attention_forward.1} parent=11 // pred_region
        _
      $region16: #{attention_forward.1} parent=11 // pred_fallthru
        _
      // Predicated region
      $region17: #{attention_forward.1} parent=11 // pred_check
        %p165 = pneg %p79
      $region18: #{attention_forward.1} parent=11 // pred_check_branch
        %167 = sbr.rel (%p165) target = $region20
      $region19: #{attention_forward.1} parent=11 // pred_region
        _
      $region20: #{attention_forward.1} parent=11 // pred_fallthru
        _
      // Predicated region
      $region21: #{attention_forward.1} parent=11 // pred_check
        %p168 = pneg %p100
      $region22: #{attention_forward.1} parent=11 // pred_check_branch
        %170 = sbr.rel (%p168) target = $region24
      $region23: #{attention_forward.1} parent=11 // pred_region
        _
      $region24: #{attention_forward.1} parent=11 // pred_fallthru
        _
      // Predicated region
      $region25: #{attention_forward.1} parent=11 // pred_check
        %p171 = pneg %p121
      $region26: #{attention_forward.1} parent=11 // pred_check_branch
        %173 = sbr.rel (%p171) target = $region28
      $region27: #{attention_forward.1} parent=11 // pred_region
        _
      $region28: #{attention_forward.1} parent=11 // pred_fallthru
        _
    $region12: #{attention_forward.1} parent=5 // pred_fallthru
      _
    %p174 = scmp.lt.s32.totalorder %s11, 2
    // Predicated region
    $region29: #{attention_forward.1} parent=5 // pred_check
      %p175 = pneg %p174
    $region30: #{attention_forward.1} parent=5 // pred_check_branch
      %177 = sbr.rel (%p175) target = $region32
    $region31: #{attention_forward.1} parent=5 // pred_region
      // Predicated region
      $region33: #{attention_forward.1} parent=31 // pred_check
        %p178 = pneg %p31
      $region34: #{attention_forward.1} parent=31 // pred_check_branch
        %180 = sbr.rel (%p178) target = $region36
      $region35: #{attention_forward.1} parent=31 // pred_region
        %s181 = smul.u32 4, %s11
        %p182 = scmp.lt.s32.totalorder %s181, 7
        %s183 = scalar_select %p182, %s181, 7
        %s184 = smul.addr %s183, 2
        %s185 = smul.addr %s184, 8
        %s186 = scalar_lea.vmem %s0, %s185
        %s187 = smul.u32 4, %s11
      $region36: #{attention_forward.1} parent=31 // pred_fallthru
        _
    $region32: #{attention_forward.1} parent=5 // pred_fallthru
      _
    %p188 = scmp.le.s32.totalorder 1, %s11
    %p189 = scmp.lt.s32.totalorder %s11, 3
    %p190 = pnand %p188, %p189
    %p191 = pneg %p190
    // Predicated region
    $region37: #{attention_forward.1} parent=5 // pred_check
      _
    $region38: #{attention_forward.1} parent=5 // pred_check_branch
      %193 = sbr.rel (%p190) target = $region40
    $region39: #{attention_forward.1} parent=5 // pred_region
      %s194 = ssub.s32 %s11, 1
      %s195 = smul.u32 4, %s16
      %p196 = scmp.lt.s32.totalorder %s195, 7
      %s197 = scalar_select %p196, %s195, 7
      %s198 = smul.addr %s197, 2
      %s199 = smul.addr %s198, 8
      %s200 = scalar_lea.vmem %s0, %s199
      %p201 = pneg %p37
      %p202 = pneg %p34
      %p203 = pneg %p58
      %p204 = pneg %p55
      %p205 = pneg %p79
      %p206 = pneg %p76
      %p207 = pneg %p100
      %p208 = pneg %p97
      %p209 = pneg %p121
      %p210 = pneg %p118
      %p211 = pneg %p147
      %p212 = pneg %p144
      %s213 = smul.u32 4, %s16
      %p214 = scmp.lt.s32.totalorder %s213, 7
      %s215 = scalar_select %p214, %s213, 7
      %s216 = smul.addr %s215, 2
      %s217 = smul.addr %s216, 8
      %s218 = scalar_lea.vmem %s5, %s217
      %s219 = smul.u32 4, %s16
      %p220 = scmp.lt.s32.totalorder %s219, 7
      %s221 = scalar_select %p220, %s219, 7
      %s222 = smul.addr %s221, 2
      %s223 = smul.addr %s222, 8
      %s224 = scalar_lea.vmem %s0, %s223
      %s225 = smul.u32 4, %s16
      %s226 = smul.u32 4, %s16
      %p227 = scmp.lt.s32.totalorder %s226, 7
      %s228 = scalar_select %p227, %s226, 7
      %s229 = smul.addr %s228, 2
      %s230 = smul.addr %s229, 8
      %s231 = scalar_lea.vmem %s5, %s230
      %s232 = smul.u32 4, %s16
      %v233 = vld [vmem:[%s224] sm:$0xff]
      %v234 = vld [vmem:[%s224 + $0x8] sm:$0xff]
      %v235 = vld [vmem:[%s224 + $0x10] sm:$0xff]
      %v236 = vld [vmem:[%s224 + $0x18] sm:$0xff]
      %v237 = vld [vmem:[%s224 + $0x20] sm:$0xff]
      %v238 = vld [vmem:[%s224 + $0x28] sm:$0xff]
      %v239 = vld [vmem:[%s224 + $0x30] sm:$0xff]
      %v240 = vld [vmem:[%s224 + $0x38] sm:$0xff]
      %v241 = vld [vmem:[%s1] sm:$0xff]
      %v242 = vld [vmem:[%s1 + $0x8] sm:$0xff]
      %v243 = vld [vmem:[%s1 + $0x10] sm:$0xff]
      %v244 = vld [vmem:[%s1 + $0x18] sm:$0xff]
      %v245 = vld [vmem:[%s1 + $0x20] sm:$0xff]
      %v246 = vld [vmem:[%s1 + $0x28] sm:$0xff]
      %v247 = vld [vmem:[%s1 + $0x30] sm:$0xff]
      %v248 = vld [vmem:[%s1 + $0x38] sm:$0xff]
      %v249 = vld [vmem:[%s1 + $0x40] sm:$0xff]
      %v250 = vld [vmem:[%s1 + $0x48] sm:$0xff]
      %v251 = vld [vmem:[%s1 + $0x50] sm:$0xff]
      %v252 = vld [vmem:[%s1 + $0x58] sm:$0xff]
      %v253 = vld [vmem:[%s1 + $0x60] sm:$0xff]
      %v254 = vld [vmem:[%s1 + $0x68] sm:$0xff]
      %v255 = vld [vmem:[%s1 + $0x70] sm:$0xff]
      %v256 = vld [vmem:[%s1 + $0x78] sm:$0xff]
      %v257 = vld [vmem:[%s1 + $0x80] sm:$0xff]
      %v258 = vld [vmem:[%s1 + $0x88] sm:$0xff]
      %v259 = vld [vmem:[%s1 + $0x90] sm:$0xff]
      %v260 = vld [vmem:[%s1 + $0x98] sm:$0xff]
      %v261 = vld [vmem:[%s1 + $0xa0] sm:$0xff]
      %v262 = vld [vmem:[%s1 + $0xa8] sm:$0xff]
      %v263 = vld [vmem:[%s1 + $0xb0] sm:$0xff]
      %v264 = vld [vmem:[%s1 + $0xb8] sm:$0xff]
      %v265 = vld [vmem:[%s1 + $0xc0] sm:$0xff]
      %v266 = vld [vmem:[%s1 + $0xc8] sm:$0xff]
      %v267 = vld [vmem:[%s1 + $0xd0] sm:$0xff]
      %v268 = vld [vmem:[%s1 + $0xd8] sm:$0xff]
      %v269 = vld [vmem:[%s1 + $0xe0] sm:$0xff]
      %v270 = vld [vmem:[%s1 + $0xe8] sm:$0xff]
      %v271 = vld [vmem:[%s1 + $0xf0] sm:$0xff]
      %v272 = vld [vmem:[%s1 + $0xf8] sm:$0xff]
      %v273 = vld [vmem:[%s2] sm:$0x1]
      %v275 = vlaneseq
      %v276 = vshrl.u32 %v275, 7
      %v277 = vsub.s32 0, %v276
      %v278 = vrot.slane %v273, %v277
      %280 = vmatprep.subr.mxu0 0.0
      %281 = vmatpush1.msra.mxu0 %v256
      %282 = vmatprep.subr.mxu0 0.0
      %283 = vmatpush1.msra.mxu0 %v255
      %284 = vmatprep.subr.mxu0 0.0
      %285 = vmatpush1.msra.mxu0 %v254
      %286 = vmatprep.subr.mxu0 0.0
      %287 = vmatpush1.msra.mxu0 %v253
      %288 = vmatprep.subr.mxu0 0.0
      %289 = vmatpush1.msra.mxu0 %v252
      %290 = vmatprep.subr.mxu0 0.0
      %291 = vmatpush1.msra.mxu0 %v251
      %292 = vmatprep.subr.mxu0 0.0
      %293 = vmatpush1.msra.mxu0 %v250
      %294 = vmatprep.subr.mxu0 0.0
      %295 = vmatpush1.msra.mxu0 %v249
      %296 = vmatprep.subr.mxu0 0.0
      %297 = vmatpush1.msra.mxu0 %v248
      %298 = vmatprep.subr.mxu0 0.0
      %299 = vmatpush1.msra.mxu0 %v247
      %300 = vmatprep.subr.mxu0 0.0
      %301 = vmatpush1.msra.mxu0 %v246
      %302 = vmatprep.subr.mxu0 0.0
      %303 = vmatpush1.msra.mxu0 %v245
      %304 = vmatprep.subr.mxu0 0.0
      %305 = vmatpush1.msra.mxu0 %v244
      %306 = vmatprep.subr.mxu0 0.0
      %307 = vmatpush1.msra.mxu0 %v243
      %308 = vmatprep.subr.mxu0 0.0
      %309 = vmatpush1.msra.mxu0 %v242
      %310 = vmatprep.subr.mxu0 0.0
      %311 = vmatpush1.msra.mxu0 %v241
      %312 = vmatprep.subr.mxu0 0.0
      %313 = vmatpush2.msra.mxu0 %v272
      %314 = vmatprep.subr.mxu0 0.0
      %315 = vmatpush2.msra.mxu0 %v271
      %316 = vmatprep.subr.mxu0 0.0
      %317 = vmatpush2.msra.mxu0 %v270
      %318 = vmatprep.subr.mxu0 0.0
      %319 = vmatpush2.msra.mxu0 %v269
      %320 = vmatprep.subr.mxu0 0.0
      %321 = vmatpush2.msra.mxu0 %v268
      %322 = vmatprep.subr.mxu0 0.0
      %323 = vmatpush2.msra.mxu0 %v267
      %324 = vmatprep.subr.mxu0 0.0
      %325 = vmatpush2.msra.mxu0 %v266
      %326 = vmatprep.subr.mxu0 0.0
      %327 = vmatpush2.msra.mxu0 %v265
      %328 = vmatprep.subr.mxu0 0.0
      %329 = vmatpush2.msra.mxu0 %v264
      %330 = vmatprep.subr.mxu0 0.0
      %331 = vmatpush2.msra.mxu0 %v263
      %332 = vmatprep.subr.mxu0 0.0
      %333 = vmatpush2.msra.mxu0 %v262
      %334 = vmatprep.subr.mxu0 0.0
      %335 = vmatpush2.msra.mxu0 %v261
      %336 = vmatprep.subr.mxu0 0.0
      %337 = vmatpush2.msra.mxu0 %v260
      %338 = vmatprep.subr.mxu0 0.0
      %339 = vmatpush2.msra.mxu0 %v259
      %340 = vmatprep.subr.mxu0 0.0
      %341 = vmatpush2.msra.mxu0 %v258
      %342 = vmatprep.subr.mxu0 0.0
      %343 = vmatpush2.msra.mxu0 %v257
      %344 = vmatprep.mubr.f32.mxu0 %v234
      %345 = vmatmul.mubr.f32.gmra.mxu0 %v233
      %v346 = vpop.f32.mrf.mxu0
      %v347 = vadd.f32 %v278, %v346
      %v348 = vpop.f32.mrf.mxu0
      %349 = vmatprep.mubr.f32.mxu0 %v236
      %350 = vmatmul.mubr.f32.gmra.mxu0 %v235
      %v351 = vpop.f32.mrf.mxu0
      %v352 = vadd.f32 %v278, %v351
      %v353 = vpop.f32.mrf.mxu0
      %354 = vmatprep.mubr.f32.mxu0 %v238
      %355 = vmatmul.mubr.f32.gmra.mxu0 %v237
      %v356 = vpop.f32.mrf.mxu0
      %v357 = vadd.f32 %v278, %v356
      %v358 = vpop.f32.mrf.mxu0
      %359 = vmatprep.mubr.f32.mxu0 %v240
      %360 = vmatmul.mubr.f32.gmra.mxu0 %v239
      %v361 = vpop.f32.mrf.mxu0
      %v362 = vadd.f32 %v278, %v361
      %v363 = vpop.f32.mrf.mxu0
      %364 = vdwg.mxu0
      %v365 = vmax.f32 %v347, 0.0
      %v366 = vmax.f32 %v352, 0.0
      %v367 = vmax.f32 %v357, 0.0
      %v368 = vmax.f32 %v362, 0.0
      %v369 = vld [vmem:[%s3] sm:$0xff]
      %v370 = vld [vmem:[%s3 + $0x8] sm:$0xff]
      %v371 = vld [vmem:[%s3 + $0x10] sm:$0xff]
      %v372 = vld [vmem:[%s3 + $0x18] sm:$0xff]
      %v373 = vld [vmem:[%s3 + $0x20] sm:$0xff]
      %v374 = vld [vmem:[%s3 + $0x28] sm:$0xff]
      %v375 = vld [vmem:[%s3 + $0x30] sm:$0xff]
      %v376 = vld [vmem:[%s3 + $0x38] sm:$0xff]
      %v377 = vld [vmem:[%s3 + $0x40] sm:$0xff]
      %v378 = vld [vmem:[%s3 + $0x48] sm:$0xff]
      %v379 = vld [vmem:[%s3 + $0x50] sm:$0xff]
      %v380 = vld [vmem:[%s3 + $0x58] sm:$0xff]
      %v381 = vld [vmem:[%s3 + $0x60] sm:$0xff]
      %v382 = vld [vmem:[%s3 + $0x68] sm:$0xff]
      %v383 = vld [vmem:[%s3 + $0x70] sm:$0xff]
      %v384 = vld [vmem:[%s3 + $0x78] sm:$0xff]
      %v385 = vld [vmem:[%s3 + $0x80] sm:$0xff]
      %v386 = vld [vmem:[%s3 + $0x88] sm:$0xff]
      %v387 = vld [vmem:[%s3 + $0x90] sm:$0xff]
      %v388 = vld [vmem:[%s3 + $0x98] sm:$0xff]
      %v389 = vld [vmem:[%s3 + $0xa0] sm:$0xff]
      %v390 = vld [vmem:[%s3 + $0xa8] sm:$0xff]
      %v391 = vld [vmem:[%s3 + $0xb0] sm:$0xff]
      %v392 = vld [vmem:[%s3 + $0xb8] sm:$0xff]
      %v393 = vld [vmem:[%s3 + $0xc0] sm:$0xff]
      %v394 = vld [vmem:[%s3 + $0xc8] sm:$0xff]
      %v395 = vld [vmem:[%s3 + $0xd0] sm:$0xff]
      %v396 = vld [vmem:[%s3 + $0xd8] sm:$0xff]
      %v397 = vld [vmem:[%s3 + $0xe0] sm:$0xff]
      %v398 = vld [vmem:[%s3 + $0xe8] sm:$0xff]
      %v399 = vld [vmem:[%s3 + $0xf0] sm:$0xff]
      %v400 = vld [vmem:[%s3 + $0xf8] sm:$0xff]
      %v401 = vld [vmem:[%s4] sm:$0x3]
      %v403 = vlaneseq
      %v404 = vshrl.u32 %v403, 7
      %v405 = vsub.s32 0, %v404
      %v406 = vrot.slane %v401, %v405
      %v407 = vlaneseq
      %v408 = vshrl.u32 %v407, 7
      %v409 = vsub.s32 1, %v408
      %v410 = vrot.slane %v401, %v409
      %413 = vmatprep.subr.mxu0 %v400
      %414 = vmatpush1.msra.mxu0 %v399
      %415 = vmatprep.subr.mxu0 %v398
      %416 = vmatpush1.msra.mxu0 %v397
      %417 = vmatprep.subr.mxu0 %v396
      %418 = vmatpush1.msra.mxu0 %v395
      %419 = vmatprep.subr.mxu0 %v394
      %420 = vmatpush1.msra.mxu0 %v393
      %421 = vmatprep.subr.mxu0 %v392
      %422 = vmatpush1.msra.mxu0 %v391
      %423 = vmatprep.subr.mxu0 %v390
      %424 = vmatpush1.msra.mxu0 %v389
      %425 = vmatprep.subr.mxu0 %v388
      %426 = vmatpush1.msra.mxu0 %v387
      %427 = vmatprep.subr.mxu0 %v386
      %428 = vmatpush1.msra.mxu0 %v385
      %429 = vmatprep.subr.mxu0 %v384
      %430 = vmatpush1.msra.mxu0 %v383
      %431 = vmatprep.subr.mxu0 %v382
      %432 = vmatpush1.msra.mxu0 %v381
      %433 = vmatprep.subr.mxu0 %v380
      %434 = vmatpush1.msra.mxu0 %v379
      %435 = vmatprep.subr.mxu0 %v378
      %436 = vmatpush1.msra.mxu0 %v377
      %437 = vmatprep.subr.mxu0 %v376
      %438 = vmatpush1.msra.mxu0 %v375
      %439 = vmatprep.subr.mxu0 %v374
      %440 = vmatpush1.msra.mxu0 %v373
      %441 = vmatprep.subr.mxu0 %v372
      %442 = vmatpush1.msra.mxu0 %v371
      %443 = vmatprep.subr.mxu0 %v370
      %444 = vmatpush1.msra.mxu0 %v369
      %445 = vmatprep.subr.mxu0 0.0
      %446 = vmatpush2.msra.mxu0 0.0
      %447 = vmatprep.subr.mxu0 0.0
      %448 = vmatpush2.msra.mxu0 0.0
      %449 = vmatprep.subr.mxu0 0.0
      %450 = vmatpush2.msra.mxu0 0.0
      %451 = vmatprep.subr.mxu0 0.0
      %452 = vmatpush2.msra.mxu0 0.0
      %453 = vmatprep.subr.mxu0 0.0
      %454 = vmatpush2.msra.mxu0 0.0
      %455 = vmatprep.subr.mxu0 0.0
      %456 = vmatpush2.msra.mxu0 0.0
      %457 = vmatprep.subr.mxu0 0.0
      %458 = vmatpush2.msra.mxu0 0.0
      %459 = vmatprep.subr.mxu0 0.0
      %460 = vmatpush2.msra.mxu0 0.0
      %461 = vmatprep.subr.mxu0 0.0
      %462 = vmatpush2.msra.mxu0 0.0
      %463 = vmatprep.subr.mxu0 0.0
      %464 = vmatpush2.msra.mxu0 0.0
      %465 = vmatprep.subr.mxu0 0.0
      %466 = vmatpush2.msra.mxu0 0.0
      %467 = vmatprep.subr.mxu0 0.0
      %468 = vmatpush2.msra.mxu0 0.0
      %469 = vmatprep.subr.mxu0 0.0
      %470 = vmatpush2.msra.mxu0 0.0
      %471 = vmatprep.subr.mxu0 0.0
      %472 = vmatpush2.msra.mxu0 0.0
      %473 = vmatprep.subr.mxu0 0.0
      %474 = vmatpush2.msra.mxu0 0.0
      %475 = vmatprep.subr.mxu0 0.0
      %476 = vmatpush2.msra.mxu0 0.0
      %477 = vmatprep.mubr.f32.mxu0 0.0
      %478 = vmatmul.mubr.f32.gmra.mxu0 %v365
      %v479 = vpop.f32.mrf.mxu0
      %v480 = vadd.f32 %v406, %v479
      %v481 = vpop.f32.mrf.mxu0
      %v482 = vadd.f32 %v410, %v481
      %483 = vmatprep.mubr.f32.mxu0 0.0
      %484 = vmatmul.mubr.f32.gmra.mxu0 %v366
      %v485 = vpop.f32.mrf.mxu0
      %v486 = vadd.f32 %v406, %v485
      %v487 = vpop.f32.mrf.mxu0
      %v488 = vadd.f32 %v410, %v487
      %489 = vmatprep.mubr.f32.mxu0 0.0
      %490 = vmatmul.mubr.f32.gmra.mxu0 %v367
      %v491 = vpop.f32.mrf.mxu0
      %v492 = vadd.f32 %v406, %v491
      %v493 = vpop.f32.mrf.mxu0
      %v494 = vadd.f32 %v410, %v493
      %495 = vmatprep.mubr.f32.mxu0 0.0
      %496 = vmatmul.mubr.f32.gmra.mxu0 %v368
      %v497 = vpop.f32.mrf.mxu0
      %v498 = vadd.f32 %v406, %v497
      %v499 = vpop.f32.mrf.mxu0
      %v500 = vadd.f32 %v410, %v499
      %501 = vdwg.mxu0
      %502 = vrot.lane.b32.xlu0 %v480, 32
      %v503 = vpop.permute.xlu0 %502
      %504 = vrot.lane.b32.xlu0 %v486, 32
      %v505 = vpop.permute.xlu0 %504
      %506 = vrot.lane.b32.xlu0 %v492, 32
      %v507 = vpop.permute.xlu0 %506
      %508 = vrot.lane.b32.xlu0 %v498, 32
      %v509 = vpop.permute.xlu0 %508
      %510 = vrot.lane.b32.xlu0 %v482, 32
      %v511 = vpop.permute.xlu0 %510
      %512 = vrot.lane.b32.xlu0 %v488, 32
      %v513 = vpop.permute.xlu0 %512
      %514 = vrot.lane.b32.xlu0 %v494, 32
      %v515 = vpop.permute.xlu0 %514
      %516 = vrot.lane.b32.xlu0 %v500, 32
      %v517 = vpop.permute.xlu0 %516
      %v518 = vlaneseq
      %v519 = vand.u32 %v518, 127
      %vm520 = vcmp.lt.s32.totalorder %v519, 32
      %v521 = vsel %vm520, %v503, %v511
      %v522 = vsel %vm520, %v505, %v513
      %v523 = vsel %vm520, %v507, %v515
      %v524 = vsel %vm520, %v509, %v517
      %v525 = vsel %vm520, %v511, %v503
      %v526 = vsel %vm520, %v513, %v505
      %v527 = vsel %vm520, %v515, %v507
      %v528 = vsel %vm520, %v517, %v509
      %v529 = vmax.f32 %v480, %v525
      %v530 = vmax.f32 %v482, %v521
      %v531 = vmax.f32 %v486, %v526
      %v532 = vmax.f32 %v488, %v522
      %v533 = vmax.f32 %v492, %v527
      %v534 = vmax.f32 %v494, %v523
      %v535 = vmax.f32 %v498, %v528
      %v536 = vmax.f32 %v500, %v524
      %537 = vrot.lane.b32.xlu0 %v529, 64
      %v538 = vpop.permute.xlu0 %537
      %539 = vrot.lane.b32.xlu0 %v531, 64
      %v540 = vpop.permute.xlu0 %539
      %541 = vrot.lane.b32.xlu0 %v533, 64
      %v542 = vpop.permute.xlu0 %541
      %543 = vrot.lane.b32.xlu0 %v535, 64
      %v544 = vpop.permute.xlu0 %543
      %545 = vrot.lane.b32.xlu0 %v530, 64
      %v546 = vpop.permute.xlu0 %545
      %547 = vrot.lane.b32.xlu0 %v532, 64
      %v548 = vpop.permute.xlu0 %547
      %549 = vrot.lane.b32.xlu0 %v534, 64
      %v550 = vpop.permute.xlu0 %549
      %551 = vrot.lane.b32.xlu0 %v536, 64
      %v552 = vpop.permute.xlu0 %551
      %vm553 = vcmp.lt.s32.totalorder %v519, 64
      %v554 = vsel %vm553, %v538, %v546
      %v555 = vsel %vm553, %v540, %v548
      %v556 = vsel %vm553, %v542, %v550
      %v557 = vsel %vm553, %v544, %v552
      %v558 = vsel %vm553, %v546, %v538
      %v559 = vsel %vm553, %v548, %v540
      %v560 = vsel %vm553, %v550, %v542
      %v561 = vsel %vm553, %v552, %v544
      %v562 = vmax.f32 %v529, %v558
      %v563 = vmax.f32 %v530, %v554
      %v564 = vmax.f32 %v531, %v559
      %v565 = vmax.f32 %v532, %v555
      %v566 = vmax.f32 %v533, %v560
      %v567 = vmax.f32 %v534, %v556
      %v568 = vmax.f32 %v535, %v561
      %v569 = vmax.f32 %v536, %v557
      %v570 = vmax.f32 %v562, %v563
      %v571 = vmax.f32 %v564, %v565
      %v572 = vmax.f32 %v566, %v567
      %v573 = vmax.f32 %v568, %v569
      %v574 = vsub.f32 %v480, %v570
      %v575 = vsub.f32 %v482, %v570
      %v576 = vsub.f32 %v486, %v571
      %v577 = vsub.f32 %v488, %v571
      %v578 = vsub.f32 %v492, %v572
      %v579 = vsub.f32 %v494, %v572
      %v580 = vsub.f32 %v498, %v573
      %v581 = vsub.f32 %v500, %v573
      %v582 = vmul.f32 %v574, 1.442695
      %v583 = vpow.pop %v582
      %v584 = vmul.f32 %v575, 1.442695
      %v585 = vpow.pop %v584
      %v586 = vmul.f32 %v576, 1.442695
      %v587 = vpow.pop %v586
      %v588 = vmul.f32 %v577, 1.442695
      %v589 = vpow.pop %v588
      %v590 = vmul.f32 %v578, 1.442695
      %v591 = vpow.pop %v590
      %v592 = vmul.f32 %v579, 1.442695
      %v593 = vpow.pop %v592
      %v594 = vmul.f32 %v580, 1.442695
      %v595 = vpow.pop %v594
      %v596 = vmul.f32 %v581, 1.442695
      %v597 = vpow.pop %v596
      %598 = vrot.lane.b32.xlu0 %v583, 32
      %v599 = vpop.permute.xlu0 %598
      %600 = vrot.lane.b32.xlu0 %v587, 32
      %v601 = vpop.permute.xlu0 %600
      %602 = vrot.lane.b32.xlu0 %v591, 32
      %v603 = vpop.permute.xlu0 %602
      %604 = vrot.lane.b32.xlu0 %v595, 32
      %v605 = vpop.permute.xlu0 %604
      %606 = vrot.lane.b32.xlu0 %v585, 32
      %v607 = vpop.permute.xlu0 %606
      %608 = vrot.lane.b32.xlu0 %v589, 32
      %v609 = vpop.permute.xlu0 %608
      %610 = vrot.lane.b32.xlu0 %v593, 32
      %v611 = vpop.permute.xlu0 %610
      %612 = vrot.lane.b32.xlu0 %v597, 32
      %v613 = vpop.permute.xlu0 %612
      %v614 = vsel %vm520, %v599, %v607
      %v615 = vsel %vm520, %v601, %v609
      %v616 = vsel %vm520, %v603, %v611
      %v617 = vsel %vm520, %v605, %v613
      %v618 = vsel %vm520, %v607, %v599
      %v619 = vsel %vm520, %v609, %v601
      %v620 = vsel %vm520, %v611, %v603
      %v621 = vsel %vm520, %v613, %v605
      %v622 = vadd.f32 %v583, %v618
      %v623 = vadd.f32 %v585, %v614
      %v624 = vadd.f32 %v587, %v619
      %v625 = vadd.f32 %v589, %v615
      %v626 = vadd.f32 %v591, %v620
      %v627 = vadd.f32 %v593, %v616
      %v628 = vadd.f32 %v595, %v621
      %v629 = vadd.f32 %v597, %v617
      %630 = vrot.lane.b32.xlu0 %v622, 64
      %v631 = vpop.permute.xlu0 %630
      %632 = vrot.lane.b32.xlu0 %v624, 64
      %v633 = vpop.permute.xlu0 %632
      %634 = vrot.lane.b32.xlu0 %v626, 64
      %v635 = vpop.permute.xlu0 %634
      %636 = vrot.lane.b32.xlu0 %v628, 64
      %v637 = vpop.permute.xlu0 %636
      %638 = vrot.lane.b32.xlu0 %v623, 64
      %v639 = vpop.permute.xlu0 %638
      %640 = vrot.lane.b32.xlu0 %v625, 64
      %v641 = vpop.permute.xlu0 %640
      %642 = vrot.lane.b32.xlu0 %v627, 64
      %v643 = vpop.permute.xlu0 %642
      %644 = vrot.lane.b32.xlu0 %v629, 64
      %v645 = vpop.permute.xlu0 %644
      %v646 = vsel %vm553, %v631, %v639
      %v647 = vsel %vm553, %v633, %v641
      %v648 = vsel %vm553, %v635, %v643
      %v649 = vsel %vm553, %v637, %v645
      %v650 = vsel %vm553, %v639, %v631
      %v651 = vsel %vm553, %v641, %v633
      %v652 = vsel %vm553, %v643, %v635
      %v653 = vsel %vm553, %v645, %v637
      %v654 = vadd.f32 %v622, %v650
      %v655 = vadd.f32 %v623, %v646
      %v656 = vadd.f32 %v624, %v651
      %v657 = vadd.f32 %v625, %v647
      %v658 = vadd.f32 %v626, %v652
      %v659 = vadd.f32 %v627, %v648
      %v660 = vadd.f32 %v628, %v653
      %v661 = vadd.f32 %v629, %v649
      %v662 = vadd.f32 %v654, %v655
      %v663 = vadd.f32 %v656, %v657
      %v664 = vadd.f32 %v658, %v659
      %v665 = vadd.f32 %v660, %v661
      %v666 = vrcp.pop %v662
      %v667 = vmul.f32 %v583, %v666
      %v668 = vmul.f32 %v585, %v666
      %v669 = vrcp.pop %v663
      %v670 = vmul.f32 %v587, %v669
      %v671 = vmul.f32 %v589, %v669
      %v672 = vrcp.pop %v664
      %v673 = vmul.f32 %v591, %v672
      %v674 = vmul.f32 %v593, %v672
      %v675 = vrcp.pop %v665
      %v676 = vmul.f32 %v595, %v675
      %v677 = vmul.f32 %v597, %v675
      %v678 = vmul.f32 %v233, %v667
      %v679 = vmul.f32 %v234, %v668
      %v680 = vmul.f32 %v235, %v670
      %v681 = vmul.f32 %v236, %v671
      %v682 = vmul.f32 %v237, %v673
      %v683 = vmul.f32 %v238, %v674
      %v684 = vmul.f32 %v239, %v676
      %v685 = vmul.f32 %v240, %v677
      %686 = vst [vmem:[%s231] sm:$0xff] %v678
      %687 = vst [vmem:[%s231 + $0x8] sm:$0xff] %v679
      %688 = vst [vmem:[%s231 + $0x10] sm:$0xff] %v680
      %689 = vst [vmem:[%s231 + $0x18] sm:$0xff] %v681
      %690 = vst [vmem:[%s231 + $0x20] sm:$0xff] %v682
      %691 = vst [vmem:[%s231 + $0x28] sm:$0xff] %v683
      %692 = vst [vmem:[%s231 + $0x30] sm:$0xff] %v684
      %693 = vst [vmem:[%s231 + $0x38] sm:$0xff] %v685
      %s694 = smul.u32 4, %s16
      %p695 = scmp.lt.s32.totalorder %s694, 7
      %s696 = scalar_select %p695, %s694, 7
      %s697 = smul.addr %s696, 2
      %s698 = smul.addr %s697, 8
      %s699 = scalar_lea.vmem %s5, %s698
      // Predicated region
      $region41: #{attention_forward.1} parent=39 // pred_check
        %p700 = pneg %p144
      $region42: #{attention_forward.1} parent=39 // pred_check_branch
        %702 = sbr.rel (%p700) target = $region44
      $region43: #{attention_forward.1} parent=39 // pred_region
        %s703 = smul.u32 4, %s16
      $region44: #{attention_forward.1} parent=39 // pred_fallthru
        _
    $region40: #{attention_forward.1} parent=5 // pred_fallthru
      _
    %p704 = scmp.le.s32.totalorder 2, %s11
    // Predicated region
    $region45: #{attention_forward.1} parent=5 // pred_check
      %p705 = pneg %p704
    $region46: #{attention_forward.1} parent=5 // pred_check_branch
      %707 = sbr.rel (%p705) target = $region48
    $region47: #{attention_forward.1} parent=5 // pred_region
      %s708 = ssub.s32 %s11, 2
      // Predicated region
      $region49: #{attention_forward.1} parent=47 // pred_check
        %p709 = pneg %p150
      $region50: #{attention_forward.1} parent=47 // pred_check_branch
        %711 = sbr.rel (%p709) target = $region52
      $region51: #{attention_forward.1} parent=47 // pred_region
        %s712 = smul.u32 4, %s17
        %p713 = scmp.lt.s32.totalorder %s712, 7
        %s714 = scalar_select %p713, %s712, 7
        %s715 = smul.addr %s714, 2
        %s716 = smul.addr %s715, 8
        %s717 = scalar_lea.vmem %s5, %s716
      $region52: #{attention_forward.1} parent=47 // pred_fallthru
        _
    $region48: #{attention_forward.1} parent=5 // pred_fallthru
      _
  $region6: #{attention_forward.1} parent=0 // loop_footer
    %s15 = sadd.s32 1, %s11
  $region7: #{attention_forward.1} parent=0 // loop_footer_branch
    %10 = sbr.rel target = $region3
  $region8: #{attention_forward.1} parent=0 // loop_exit
    _

</llo_original>
